<compile_context>
chip_gen: v7x
topology: tpu7x:2x2x1
jax: 0.10.0
libtpu: 0.0.40
codegen_flags: <defaults>
</compile_context>

<pallas_src>
import jax
import jax.numpy as jnp
from jax.experimental import pallas as pl
from jax.experimental.pallas import tpu as pltpu


def _round_up(x, m):
    return (x + m - 1) // m * m


def _item_tower_kernel(x_ref, w1_ref, b1_ref, w2_ref, b2_ref, w3_ref, b3_ref, o_ref):
    """One (TILE_B, D) batch tile of the 3-layer MLP.

    bf16 operands into the MXU, f32 accumulation, f32 bias-add + ReLU.
    """
    h = jnp.dot(x_ref[...], w1_ref[...], preferred_element_type=jnp.float32)
    h = jnp.maximum(h + b1_ref[...], 0.0)

    h = jnp.dot(h.astype(jnp.bfloat16), w2_ref[...],
                preferred_element_type=jnp.float32)
    h = jnp.maximum(h + b2_ref[...], 0.0)

    h = jnp.dot(h.astype(jnp.bfloat16), w3_ref[...],
                preferred_element_type=jnp.float32)
    h = jnp.maximum(h + b3_ref[...], 0.0)

    o_ref[...] = h


def item_tower_forward(x, params, *, tile_b=1024):
    """Pallas wrapper: x is (B, input_dim) f32, returns (B, 32) f32."""
    B, D = x.shape
    w1, b1 = params["w1"], params["b1"]
    w2, b2 = params["w2"], params["b2"]
    w3, b3 = params["w3"], params["b3"]
    d_pad = w1.shape[0]          # feature dim already padded at init
    out_dim = w3.shape[1]        # 32

    # Batch tile: large to amortize the ~0.35 us/step grid overhead, clipped
    # (to a multiple of 16 for bf16 sublane packing) when B is small.
    tile_b = min(tile_b, _round_up(B, 16))
    b_pad = _round_up(B, tile_b)

    x_p = x
    if (b_pad, d_pad) != (B, D):
        x_p = jnp.pad(x, ((0, b_pad - B), (0, d_pad - D)))
    x_p = x_p.astype(jnp.bfloat16)

    const = lambda i: (0, 0)     # weights/biases: resident in VMEM, never re-fetched

    out = pl.pallas_call(
        _item_tower_kernel,
        out_shape=jax.ShapeDtypeStruct((b_pad, out_dim), jnp.float32),
        grid=(b_pad // tile_b,),
        in_specs=[
            pl.BlockSpec((tile_b, d_pad), lambda i: (i, 0)),
            pl.BlockSpec(w1.shape, const),
            pl.BlockSpec(b1.shape, const),
            pl.BlockSpec(w2.shape, const),
            pl.BlockSpec(b2.shape, const),
            pl.BlockSpec(w3.shape, const),
            pl.BlockSpec(b3.shape, const),
        ],
        out_specs=pl.BlockSpec((tile_b, out_dim), lambda i: (i, 0)),
        compiler_params=pltpu.CompilerParams(
            dimension_semantics=("parallel",),
        ),
    )(x_p, w1, b1, w2, b2, w3, b3)

    return out[:B]


def _linear_init(key, fan_in, fan_out, fan_in_padded):
    """torch.nn.Linear default init (uniform +-1/sqrt(fan_in)); W stored (in, out),
    zero-padded along the input dim, bf16 weights / f32 bias."""
    kw, kb = jax.random.split(key)
    bound = float(fan_in) ** -0.5
    w = jax.random.uniform(kw, (fan_in, fan_out), jnp.float32, -bound, bound)
    if fan_in_padded != fan_in:
        w = jnp.pad(w, ((0, fan_in_padded - fan_in), (0, 0)))
    b = jax.random.uniform(kb, (1, fan_out), jnp.float32, -bound, bound)
    return w.astype(jnp.bfloat16), b


def init_params(key, input_dim):
    d_pad = _round_up(input_dim, 16)   # bf16 sublane packing of W1's K dim
    k1, k2, k3 = jax.random.split(key, 3)
    w1, b1 = _linear_init(k1, input_dim, 128, d_pad)
    w2, b2 = _linear_init(k2, 128, 64, 128)
    w3, b3 = _linear_init(k3, 64, 32, 64)
    return dict(w1=w1, b1=b1, w2=w2, b2=b2, w3=w3, b3=b3)


def _reference_forward(x, params):
    """Plain-JAX reference mirroring the kernel's bf16-operand / f32-accumulate math."""
    D = x.shape[1]
    w1 = params["w1"].astype(jnp.float32)
    w2 = params["w2"].astype(jnp.float32)
    w3 = params["w3"].astype(jnp.float32)
    d_pad = w1.shape[0]

    h = jnp.pad(x, ((0, 0), (0, d_pad - D)))
    h = h.astype(jnp.bfloat16).astype(jnp.float32)
    h = jnp.maximum(h @ w1 + params["b1"], 0.0)
    h = h.astype(jnp.bfloat16).astype(jnp.float32)
    h = jnp.maximum(h @ w2 + params["b2"], 0.0)
    h = h.astype(jnp.bfloat16).astype(jnp.float32)
    h = jnp.maximum(h @ w3 + params["b3"], 0.0)
    return h


if __name__ == "__main__":
    key = jax.random.PRNGKey(0)
    k_x, k_params = jax.random.split(key)

    B = 2
    INPUT_DIM = 24

    x = jax.random.normal(k_x, (B, INPUT_DIM), jnp.float32)
    params = init_params(k_params, INPUT_DIM)

    out = item_tower_forward(x, params)
    out = jax.block_until_ready(out)

    ref = _reference_forward(x, params)
    assert out.shape == (B, 32), out.shape
    assert jnp.allclose(out, ref, atol=1e-3, rtol=1e-3), (out, ref)

    print("KERNEL_OK")
</pallas_src>

<mosaic_0001>
module attributes {stable_mosaic.version = 11 : i64} {
  func.func @_item_tower_kernel(%arg0: i32, %arg1: memref<16x32xbf16, #tpu.memory_space<vmem>>, %arg2: memref<32x128xbf16, #tpu.memory_space<vmem>>, %arg3: memref<1x128xf32, #tpu.memory_space<vmem>>, %arg4: memref<128x64xbf16, #tpu.memory_space<vmem>>, %arg5: memref<1x64xf32, #tpu.memory_space<vmem>>, %arg6: memref<64x32xbf16, #tpu.memory_space<vmem>>, %arg7: memref<1x32xf32, #tpu.memory_space<vmem>>, %arg8: memref<16x32xf32, #tpu.memory_space<vmem>>) attributes {dimension_semantics = [#tpu.dimension_semantics<parallel>], iteration_bounds = array<i64: 1>, scalar_prefetch = 0 : i64, scratch_operands = 0 : i64, tpu.core_type = #tpu.core_type<tc>, window_params = [{transform_indices = @transform_0, window_bounds = array<i64: 16, 32>}, {pipeline_mode = #tpu.pipeline_mode<synchronous>, transform_indices = @transform_1, window_bounds = array<i64: 32, 128>}, {pipeline_mode = #tpu.pipeline_mode<synchronous>, transform_indices = @transform_2, window_bounds = array<i64: 1, 128>}, {pipeline_mode = #tpu.pipeline_mode<synchronous>, transform_indices = @transform_3, window_bounds = array<i64: 128, 64>}, {pipeline_mode = #tpu.pipeline_mode<synchronous>, transform_indices = @transform_4, window_bounds = array<i64: 1, 64>}, {pipeline_mode = #tpu.pipeline_mode<synchronous>, transform_indices = @transform_5, window_bounds = array<i64: 64, 32>}, {pipeline_mode = #tpu.pipeline_mode<synchronous>, transform_indices = @transform_6, window_bounds = array<i64: 1, 32>}, {transform_indices = @transform_7, window_bounds = array<i64: 16, 32>}]} {
    %c0 = arith.constant 0 : index
    %c0_0 = arith.constant 0 : index
    %0 = vector.load %arg1[%c0, %c0_0] : memref<16x32xbf16, #tpu.memory_space<vmem>>, vector<16x32xbf16>
    %c0_1 = arith.constant 0 : index
    %c0_2 = arith.constant 0 : index
    %1 = vector.load %arg2[%c0_1, %c0_2] : memref<32x128xbf16, #tpu.memory_space<vmem>>, vector<32x128xbf16>
    %cst = arith.constant dense<0.000000e+00> : vector<16x128xf32>
    %2 = tpu.matmul %0, %1, %cst {dimension_numbers = #tpu.dot_dimension_numbers<[1], [0], [0], [1], [0, 0, 1, 1], [], []>} : vector<16x32xbf16>, vector<32x128xbf16>, vector<16x128xf32> -> vector<16x128xf32>
    %c0_3 = arith.constant 0 : index
    %c0_4 = arith.constant 0 : index
    %3 = vector.load %arg3[%c0_3, %c0_4] : memref<1x128xf32, #tpu.memory_space<vmem>>, vector<1x128xf32>
    %4 = vector.broadcast %3 : vector<1x128xf32> to vector<16x128xf32>
    %5 = arith.addf %2, %4 : vector<16x128xf32>
    %cst_5 = arith.constant 0.000000e+00 : f32
    %6 = vector.broadcast %cst_5 : f32 to vector<16x128xf32>
    %7 = arith.maximumf %5, %6 : vector<16x128xf32>
    %8 = arith.truncf %7 : vector<16x128xf32> to vector<16x128xbf16>
    %c0_6 = arith.constant 0 : index
    %c0_7 = arith.constant 0 : index
    %9 = vector.load %arg4[%c0_6, %c0_7] : memref<128x64xbf16, #tpu.memory_space<vmem>>, vector<128x64xbf16>
    %cst_8 = arith.constant dense<0.000000e+00> : vector<16x64xf32>
    %10 = tpu.matmul %8, %9, %cst_8 {dimension_numbers = #tpu.dot_dimension_numbers<[1], [0], [0], [1], [0, 0, 1, 1], [], []>} : vector<16x128xbf16>, vector<128x64xbf16>, vector<16x64xf32> -> vector<16x64xf32>
    %c0_9 = arith.constant 0 : index
    %c0_10 = arith.constant 0 : index
    %11 = vector.load %arg5[%c0_9, %c0_10] : memref<1x64xf32, #tpu.memory_space<vmem>>, vector<1x64xf32>
    %12 = vector.broadcast %11 : vector<1x64xf32> to vector<16x64xf32>
    %13 = arith.addf %10, %12 : vector<16x64xf32>
    %cst_11 = arith.constant 0.000000e+00 : f32
    %14 = vector.broadcast %cst_11 : f32 to vector<16x64xf32>
    %15 = arith.maximumf %13, %14 : vector<16x64xf32>
    %16 = arith.truncf %15 : vector<16x64xf32> to vector<16x64xbf16>
    %c0_12 = arith.constant 0 : index
    %c0_13 = arith.constant 0 : index
    %17 = vector.load %arg6[%c0_12, %c0_13] : memref<64x32xbf16, #tpu.memory_space<vmem>>, vector<64x32xbf16>
    %cst_14 = arith.constant dense<0.000000e+00> : vector<16x32xf32>
    %18 = tpu.matmul %16, %17, %cst_14 {dimension_numbers = #tpu.dot_dimension_numbers<[1], [0], [0], [1], [0, 0, 1, 1], [], []>} : vector<16x64xbf16>, vector<64x32xbf16>, vector<16x32xf32> -> vector<16x32xf32>
    %c0_15 = arith.constant 0 : index
    %c0_16 = arith.constant 0 : index
    %19 = vector.load %arg7[%c0_15, %c0_16] : memref<1x32xf32, #tpu.memory_space<vmem>>, vector<1x32xf32>
    %20 = vector.broadcast %19 : vector<1x32xf32> to vector<16x32xf32>
    %21 = arith.addf %18, %20 : vector<16x32xf32>
    %cst_17 = arith.constant 0.000000e+00 : f32
    %22 = vector.broadcast %cst_17 : f32 to vector<16x32xf32>
    %23 = arith.maximumf %21, %22 : vector<16x32xf32>
    %c0_18 = arith.constant 0 : index
    %c0_19 = arith.constant 0 : index
    %24 = vector.load %arg8[%c0_18, %c0_19] : memref<16x32xf32, #tpu.memory_space<vmem>>, vector<16x32xf32>
    tpu.vector_store %arg8[%c0_18, %c0_19], %23 {strides = array<i32>} : memref<16x32xf32, #tpu.memory_space<vmem>>, vector<16x32xf32>,
    return
  }
  func.func @transform_0(%arg0: i32) -> (i32, i32) {
    %c0_i32 = arith.constant 0 : i32
    %c0_i32_0 = arith.constant 0 : i32
    return %arg0, %c0_i32 : i32, i32
  }
  func.func @transform_1(%arg0: i32) -> (i32, i32) {
    %c0_i32 = arith.constant 0 : i32
    %c0_i32_0 = arith.constant 0 : i32
    %c0_i32_1 = arith.constant 0 : i32
    return %c0_i32, %c0_i32_0 : i32, i32
  }
  func.func @transform_2(%arg0: i32) -> (i32, i32) {
    %c0_i32 = arith.constant 0 : i32
    %c0_i32_0 = arith.constant 0 : i32
    %c0_i32_1 = arith.constant 0 : i32
    return %c0_i32, %c0_i32_0 : i32, i32
  }
  func.func @transform_3(%arg0: i32) -> (i32, i32) {
    %c0_i32 = arith.constant 0 : i32
    %c0_i32_0 = arith.constant 0 : i32
    %c0_i32_1 = arith.constant 0 : i32
    return %c0_i32, %c0_i32_0 : i32, i32
  }
  func.func @transform_4(%arg0: i32) -> (i32, i32) {
    %c0_i32 = arith.constant 0 : i32
    %c0_i32_0 = arith.constant 0 : i32
    %c0_i32_1 = arith.constant 0 : i32
    return %c0_i32, %c0_i32_0 : i32, i32
  }
  func.func @transform_5(%arg0: i32) -> (i32, i32) {
    %c0_i32 = arith.constant 0 : i32
    %c0_i32_0 = arith.constant 0 : i32
    %c0_i32_1 = arith.constant 0 : i32
    return %c0_i32, %c0_i32_0 : i32, i32
  }
  func.func @transform_6(%arg0: i32) -> (i32, i32) {
    %c0_i32 = arith.constant 0 : i32
    %c0_i32_0 = arith.constant 0 : i32
    %c0_i32_1 = arith.constant 0 : i32
    return %c0_i32, %c0_i32_0 : i32, i32
  }
  func.func @transform_7(%arg0: i32) -> (i32, i32) {
    %c0_i32 = arith.constant 0 : i32
    %c0_i32_0 = arith.constant 0 : i32
    return %arg0, %c0_i32 : i32, i32
  }
}

</mosaic_0001>

<llo_original>
// kernel: tpu_custom_call.1
$region0: #{tpu_custom_call.1}
  #allocation0 [shape = 'u32[]', space=smem, size = 0x4, offset = 0x4, fixed_abs, tag = 'smem constant byte address 0x4 - core index']
  #allocation1 [shape = 'u32[144,128]{1,0:T(1,128)}', space=vmem, size = 0x12000, scoped, tag = 'internal scratch']
  %s0 = inlined_call_operand.vmem [shape: bf16[16,32], index: 0, kind: input, shape index: {}]
  %s1 = inlined_call_operand.vmem [shape: bf16[32,128], index: 1, kind: input, shape index: {}]
  %s2 = inlined_call_operand.vmem [shape: f32[1,128], index: 2, kind: input, shape index: {}]
  %s3 = inlined_call_operand.vmem [shape: bf16[128,64], index: 3, kind: input, shape index: {}]
  %s4 = inlined_call_operand.vmem [shape: f32[1,64], index: 4, kind: input, shape index: {}]
  %s5 = inlined_call_operand.vmem [shape: bf16[64,32], index: 5, kind: input, shape index: {}]
  %s6 = inlined_call_operand.vmem [shape: f32[1,32], index: 6, kind: input, shape index: {}]
  %s7 = inlined_call_operand.hbm [shape: f32[16,32], index: 7, kind: output, shape index: {}]
  %s8 = sld [smem:[#allocation0]]
  $region38: #{tpu_custom_call.1} parent=0
    _
  %s10 = ssub.s32 1, %s8
  %s11 = scalar_select 0, %s10, %s8
  $region1: #{tpu_custom_call.1} parent=0
    #allocation2 [shape = 'u8[8192]{0}', space=vmem, size = 0x2000, scoped, tag = 'output window, operand 0, single buffered']
    #allocation3 [shape = 's32[1]{0}', space=sflag, size = 0x4, scoped, tag = 'scoped memory for tpu_custom_call.1']
    %12 = vsyncpa [#allocation3], 0
    // Predicated region
    $region2: #{tpu_custom_call.1} parent=1 // pred_check
      _
    $region3: #{tpu_custom_call.1} parent=1 // pred_check_branch
      %14 = sbr.rel (0) target = $region5
    $region4: #{tpu_custom_call.1} parent=1 // pred_region
      _
    $region5: #{tpu_custom_call.1} parent=1 // pred_fallthru
      _
    // Predicated region
    $region6: #{tpu_custom_call.1} parent=1 // pred_check
      _
    $region7: #{tpu_custom_call.1} parent=1 // pred_check_branch
      %16 = sbr.rel (0) target = $region9
    $region8: #{tpu_custom_call.1} parent=1 // pred_region
      _
    $region9: #{tpu_custom_call.1} parent=1 // pred_fallthru
      _
    // Predicated region
    $region10: #{tpu_custom_call.1} parent=1 // pred_check
      _
    $region11: #{tpu_custom_call.1} parent=1 // pred_check_branch
      %18 = sbr.rel (0) target = $region13
    $region12: #{tpu_custom_call.1} parent=1 // pred_region
      _
    $region13: #{tpu_custom_call.1} parent=1 // pred_fallthru
      _
    // Predicated region
    $region14: #{tpu_custom_call.1} parent=1 // pred_check
      _
    $region15: #{tpu_custom_call.1} parent=1 // pred_check_branch
      %20 = sbr.rel (0) target = $region17
    $region16: #{tpu_custom_call.1} parent=1 // pred_region
      _
    $region17: #{tpu_custom_call.1} parent=1 // pred_fallthru
      _
    // Predicated region
    $region18: #{tpu_custom_call.1} parent=1 // pred_check
      _
    $region19: #{tpu_custom_call.1} parent=1 // pred_check_branch
      %22 = sbr.rel (0) target = $region21
    $region20: #{tpu_custom_call.1} parent=1 // pred_region
      _
    $region21: #{tpu_custom_call.1} parent=1 // pred_fallthru
      _
    // Predicated region
    $region22: #{tpu_custom_call.1} parent=1 // pred_check
      _
    $region23: #{tpu_custom_call.1} parent=1 // pred_check_branch
      %24 = sbr.rel (0) target = $region25
    $region24: #{tpu_custom_call.1} parent=1 // pred_region
      _
    $region25: #{tpu_custom_call.1} parent=1 // pred_fallthru
      _
    // Predicated region
    $region26: #{tpu_custom_call.1} parent=1 // pred_check
      _
    $region27: #{tpu_custom_call.1} parent=1 // pred_check_branch
      %26 = sbr.rel (0) target = $region29
    $region28: #{tpu_custom_call.1} parent=1 // pred_region
      _
    $region29: #{tpu_custom_call.1} parent=1 // pred_fallthru
      _
    %v28 = vld [vmem:[%s0] sm:$0xf]
    %v29 = vld [vmem:[%s0 + $0x4] sm:$0xf]
    %v30 = vld [vmem:[%s1] sm:$0xf]
    %v31 = vld [vmem:[%s1 + $0x4] sm:$0xf]
    %v32 = vld [vmem:[%s1 + $0x8] sm:$0xf]
    %v33 = vld [vmem:[%s1 + $0xc] sm:$0xf]
    %v34 = vld [vmem:[%s2] sm:$0x1]
    %v36 = vlaneseq
    %v37 = vshrl.u32 %v36, 7
    %v38 = vsub.s32 0, %v37
    %v39 = vrot.slane %v34, %v38
    %v43 = vunpack.c.l.b16 %v28
    %v44 = vunpack.c.l.b16 %v29
    %v45 = vpack.c.b16 %v44, %v43
    %v50 = vunpack.c.l.b16 %v30
    %v51 = vunpack.c.l.b16 %v31
    %v52 = vunpack.c.l.b16 %v32
    %v53 = vunpack.c.l.b16 %v33
    %v54 = vpack.c.b16 %v51, %v50
    %v55 = vpack.c.b16 %v53, %v52
    %vm58 = vcmask 261120
    %v60 = vsel %vm58, %v45, 0
    %62 = vmatprep.subr.bf16.mxu0 0
    %63 = vmatpush1.bf16.msra.mxu0 %v54
    %64 = vmatprep.subr.bf16.mxu0 0
    %65 = vmatpush1.bf16.msra.mxu0 %v55
    %66 = vmatprep.subr.bf16.mxu0 0
    %67 = vmatpush1.bf16.msra.mxu0 0
    %68 = vmatprep.subr.bf16.mxu0 0
    %69 = vmatpush1.bf16.msra.mxu0 0
    %70 = vmatprep.subr.bf16.mxu0 0
    %71 = vmatpush1.bf16.msra.mxu0 0
    %72 = vmatprep.subr.bf16.mxu0 0
    %73 = vmatpush1.bf16.msra.mxu0 0
    %74 = vmatprep.subr.bf16.mxu0 0
    %75 = vmatpush1.bf16.msra.mxu0 0
    %76 = vmatprep.subr.bf16.mxu0 0
    %77 = vmatpush1.bf16.msra.mxu0 0
    %78 = vmatprep.subr.bf16.mxu0 0
    %79 = vmatpush1.bf16.msra.mxu0 0
    %80 = vmatprep.subr.bf16.mxu0 0
    %81 = vmatpush1.bf16.msra.mxu0 0
    %82 = vmatprep.subr.bf16.mxu0 0
    %83 = vmatpush1.bf16.msra.mxu0 0
    %84 = vmatprep.subr.bf16.mxu0 0
    %85 = vmatpush1.bf16.msra.mxu0 0
    %86 = vmatprep.subr.bf16.mxu0 0
    %87 = vmatpush1.bf16.msra.mxu0 0
    %88 = vmatprep.subr.bf16.mxu0 0
    %89 = vmatpush1.bf16.msra.mxu0 0
    %90 = vmatprep.subr.bf16.mxu0 0
    %91 = vmatpush1.bf16.msra.mxu0 0
    %92 = vmatprep.subr.bf16.mxu0 0
    %93 = vmatpush1.bf16.msra.mxu0 0
    %94 = vmatprep.mubr.bf16.mxu0 0
    %95 = vmatmul.mubr.bf16.gmra.mrb[0].mxu0 %v60
    %v96 = vpop.f32.mrb[0].mxu0
    %v97 = vadd.f32 %v39, %v96
    %v98 = vpop.f32.mrb[0].mxu0
    %v99 = vpop.f32.mrb[0].mxu0
    %v100 = vadd.f32 %v39, %v99
    %v101 = vpop.f32.mrb[0].mxu0
    %102 = vdwg.mxu0
    %v103 = vmax.f32 %v97, 0.0
    %v104 = vmax.f32 %v100, 0.0
    %v105 = vpack.c.bf16 %v104, %v103
    %v106 = vld [vmem:[%s3] sm:$0xf]
    %v107 = vld [vmem:[%s3 + $0x4] sm:$0xf]
    %v108 = vld [vmem:[%s3 + $0x8] sm:$0xf]
    %v109 = vld [vmem:[%s3 + $0xc] sm:$0xf]
    %v110 = vld [vmem:[%s3 + $0x10] sm:$0xf]
    %v111 = vld [vmem:[%s3 + $0x14] sm:$0xf]
    %v112 = vld [vmem:[%s3 + $0x18] sm:$0xf]
    %v113 = vld [vmem:[%s3 + $0x1c] sm:$0xf]
    %v114 = vld [vmem:[%s3 + $0x20] sm:$0xf]
    %v115 = vld [vmem:[%s3 + $0x24] sm:$0xf]
    %v116 = vld [vmem:[%s3 + $0x28] sm:$0xf]
    %v117 = vld [vmem:[%s3 + $0x2c] sm:$0xf]
    %v118 = vld [vmem:[%s3 + $0x30] sm:$0xf]
    %v119 = vld [vmem:[%s3 + $0x34] sm:$0xf]
    %v120 = vld [vmem:[%s3 + $0x38] sm:$0xf]
    %v121 = vld [vmem:[%s3 + $0x3c] sm:$0xf]
    %v122 = vld [vmem:[%s4] sm:$0x1]
    %v124 = vlaneseq
    %v125 = vshrl.u32 %v124, 7
    %v126 = vsub.s32 0, %v125
    %v127 = vrot.slane %v122, %v126
    %v145 = vunpack.c.l.b16 %v106
    %v146 = vunpack.c.l.b16 %v107
    %v147 = vunpack.c.l.b16 %v108
    %v148 = vunpack.c.l.b16 %v109
    %v149 = vunpack.c.l.b16 %v110
    %v150 = vunpack.c.l.b16 %v111
    %v151 = vunpack.c.l.b16 %v112
    %v152 = vunpack.c.l.b16 %v113
    %v153 = vunpack.c.l.b16 %v114
    %v154 = vunpack.c.l.b16 %v115
    %v155 = vunpack.c.l.b16 %v116
    %v156 = vunpack.c.l.b16 %v117
    %v157 = vunpack.c.l.b16 %v118
    %v158 = vunpack.c.l.b16 %v119
    %v159 = vunpack.c.l.b16 %v120
    %v160 = vunpack.c.l.b16 %v121
    %v161 = vpack.c.b16 %v146, %v145
    %v162 = vpack.c.b16 %v148, %v147
    %v163 = vpack.c.b16 %v150, %v149
    %v164 = vpack.c.b16 %v152, %v151
    %v165 = vpack.c.b16 %v154, %v153
    %v166 = vpack.c.b16 %v156, %v155
    %v167 = vpack.c.b16 %v158, %v157
    %v168 = vpack.c.b16 %v160, %v159
    %177 = vmatprep.subr.bf16.mxu0 0
    %178 = vmatpush1.bf16.msra.mxu0 %v161
    %179 = vmatprep.subr.bf16.mxu0 0
    %180 = vmatpush1.bf16.msra.mxu0 %v162
    %181 = vmatprep.subr.bf16.mxu0 0
    %182 = vmatpush1.bf16.msra.mxu0 %v163
    %183 = vmatprep.subr.bf16.mxu0 0
    %184 = vmatpush1.bf16.msra.mxu0 %v164
    %185 = vmatprep.subr.bf16.mxu0 0
    %186 = vmatpush1.bf16.msra.mxu0 %v165
    %187 = vmatprep.subr.bf16.mxu0 0
    %188 = vmatpush1.bf16.msra.mxu0 %v166
    %189 = vmatprep.subr.bf16.mxu0 0
    %190 = vmatpush1.bf16.msra.mxu0 %v167
    %191 = vmatprep.subr.bf16.mxu0 0
    %192 = vmatpush1.bf16.msra.mxu0 %v168
    %193 = vmatprep.subr.bf16.mxu0 0
    %194 = vmatpush1.bf16.msra.mxu0 0
    %195 = vmatprep.subr.bf16.mxu0 0
    %196 = vmatpush1.bf16.msra.mxu0 0
    %197 = vmatprep.subr.bf16.mxu0 0
    %198 = vmatpush1.bf16.msra.mxu0 0
    %199 = vmatprep.subr.bf16.mxu0 0
    %200 = vmatpush1.bf16.msra.mxu0 0
    %201 = vmatprep.subr.bf16.mxu0 0
    %202 = vmatpush1.bf16.msra.mxu0 0
    %203 = vmatprep.subr.bf16.mxu0 0
    %204 = vmatpush1.bf16.msra.mxu0 0
    %205 = vmatprep.subr.bf16.mxu0 0
    %206 = vmatpush1.bf16.msra.mxu0 0
    %207 = vmatprep.subr.bf16.mxu0 0
    %208 = vmatpush1.bf16.msra.mxu0 0
    %209 = vmatprep.mubr.bf16.mxu0 0
    %210 = vmatmul.mubr.bf16.gmra.mrb[0].mxu0 %v105
    %v211 = vpop.f32.mrb[0].mxu0
    %v212 = vadd.f32 %v127, %v211
    %v213 = vpop.f32.mrb[0].mxu0
    %v214 = vpop.f32.mrb[0].mxu0
    %v215 = vadd.f32 %v127, %v214
    %v216 = vpop.f32.mrb[0].mxu0
    %217 = vdwg.mxu0
    %v218 = vmax.f32 %v212, 0.0
    %v219 = vmax.f32 %v215, 0.0
    %v220 = vpack.c.bf16 %v219, %v218
    %v221 = vld [vmem:[%s5] sm:$0xf]
    %v222 = vld [vmem:[%s5 + $0x4] sm:$0xf]
    %v223 = vld [vmem:[%s5 + $0x8] sm:$0xf]
    %v224 = vld [vmem:[%s5 + $0xc] sm:$0xf]
    %v225 = vld [vmem:[%s5 + $0x10] sm:$0xf]
    %v226 = vld [vmem:[%s5 + $0x14] sm:$0xf]
    %v227 = vld [vmem:[%s5 + $0x18] sm:$0xf]
    %v228 = vld [vmem:[%s5 + $0x1c] sm:$0xf]
    %v229 = vld [vmem:[%s6] sm:$0x1]
    %v231 = vlaneseq
    %v232 = vshrl.u32 %v231, 7
    %v233 = vsub.s32 0, %v232
    %v234 = vrot.slane %v229, %v233
    %v244 = vunpack.c.l.b16 %v221
    %v245 = vunpack.c.l.b16 %v222
    %v246 = vunpack.c.l.b16 %v223
    %v247 = vunpack.c.l.b16 %v224
    %v248 = vunpack.c.l.b16 %v225
    %v249 = vunpack.c.l.b16 %v226
    %v250 = vunpack.c.l.b16 %v227
    %v251 = vunpack.c.l.b16 %v228
    %v252 = vpack.c.b16 %v245, %v244
    %v253 = vpack.c.b16 %v247, %v246
    %v254 = vpack.c.b16 %v249, %v248
    %v255 = vpack.c.b16 %v251, %v250
    %vm260 = vcmask 523264
    %v262 = vsel %vm260, %v220, 0
    %264 = vmatprep.subr.bf16.mxu0 0
    %265 = vmatpush1.bf16.msra.mxu0 %v252
    %266 = vmatprep.subr.bf16.mxu0 0
    %267 = vmatpush1.bf16.msra.mxu0 %v253
    %268 = vmatprep.subr.bf16.mxu0 0
    %269 = vmatpush1.bf16.msra.mxu0 %v254
    %270 = vmatprep.subr.bf16.mxu0 0
    %271 = vmatpush1.bf16.msra.mxu0 %v255
    %272 = vmatprep.subr.bf16.mxu0 0
    %273 = vmatpush1.bf16.msra.mxu0 0
    %274 = vmatprep.subr.bf16.mxu0 0
    %275 = vmatpush1.bf16.msra.mxu0 0
    %276 = vmatprep.subr.bf16.mxu0 0
    %277 = vmatpush1.bf16.msra.mxu0 0
    %278 = vmatprep.subr.bf16.mxu0 0
    %279 = vmatpush1.bf16.msra.mxu0 0
    %280 = vmatprep.subr.bf16.mxu0 0
    %281 = vmatpush1.bf16.msra.mxu0 0
    %282 = vmatprep.subr.bf16.mxu0 0
    %283 = vmatpush1.bf16.msra.mxu0 0
    %284 = vmatprep.subr.bf16.mxu0 0
    %285 = vmatpush1.bf16.msra.mxu0 0
    %286 = vmatprep.subr.bf16.mxu0 0
    %287 = vmatpush1.bf16.msra.mxu0 0
    %288 = vmatprep.subr.bf16.mxu0 0
    %289 = vmatpush1.bf16.msra.mxu0 0
    %290 = vmatprep.subr.bf16.mxu0 0
    %291 = vmatpush1.bf16.msra.mxu0 0
    %292 = vmatprep.subr.bf16.mxu0 0
    %293 = vmatpush1.bf16.msra.mxu0 0
    %294 = vmatprep.subr.bf16.mxu0 0
    %295 = vmatpush1.bf16.msra.mxu0 0
    %296 = vmatprep.mubr.bf16.mxu0 0
    %297 = vmatmul.mubr.bf16.gmra.mrb[0].mxu0 %v262
    %v298 = vpop.f32.mrb[0].mxu0
    %v299 = vadd.f32 %v234, %v298
    %v300 = vpop.f32.mrb[0].mxu0
    %v301 = vpop.f32.mrb[0].mxu0
    %v302 = vadd.f32 %v234, %v301
    %v303 = vpop.f32.mrb[0].mxu0
    %304 = vdwg.mxu0
    %v305 = vmax.f32 %v299, 0.0
    %v306 = vmax.f32 %v302, 0.0
    %307 = vst.msk [vmem:[#allocation2] sm:$0xff] %vm58, %v305
    %308 = vst.msk [vmem:[#allocation2 + $0x8] sm:$0xff] %vm58, %v306
    // Predicated region
    $region30: #{tpu_custom_call.1} parent=1 // pred_check
      _
    $region31: #{tpu_custom_call.1} parent=1 // pred_check_branch
      %310 = sbr.rel (0) target = $region33
    $region32: #{tpu_custom_call.1} parent=1 // pred_region
      %s312 = ssub.s32 256, 256
      %313 = vsyncadd [#allocation3], %s312
      %s314 = sshll.u32 [#allocation2], 4
      %s315 = int_to_ptr.vmem [resolvable:$true] %s314
      %320 = dma.vmem_to_hbm [thread:$0]  %s315, 256, %s7, [#allocation3], 128, 128, 8
    $region33: #{tpu_custom_call.1} parent=1 // pred_fallthru
      _
    // Predicated region
    $region34: #{tpu_custom_call.1} parent=1 // pred_check
      _
    $region35: #{tpu_custom_call.1} parent=1 // pred_check_branch
      %322 = sbr.rel (0) target = $region37
    $region36: #{tpu_custom_call.1} parent=1 // pred_region
      %323 = dma.done [#allocation3], 256
    $region37: #{tpu_custom_call.1} parent=1 // pred_fallthru
      _
    %324 = vsyncpa [#allocation3], 1

</llo_original>
